<compile_context>
chip_gen: v7x
topology: tpu7x:2x2x1
jax: 0.10.0
libtpu: 0.0.40
codegen_flags: <defaults>
</compile_context>

<pallas_src>
import functools

import jax
import jax.numpy as jnp
from jax import lax
from jax.experimental import pallas as pl
from jax.experimental.pallas import tpu as pltpu

SMOOTH = 1e-5
_LANES = 128


# ---------------------------------------------------------------------------
# Kernel
# ---------------------------------------------------------------------------
def _dice_kernel(x_ref, t_ref, o_ref, *, n_classes, hw, apply_softmax,
                 needs_mask):
    """x_ref: (C, TR, 128) scores; t_ref: (TR, 128) integer labels;
    o_ref: (3, C, 128) per-(batch, split) partial sums
           [0]=intersect, [1]=z_sum (sum score^2), [2]=y_sum (class counts)."""
    C = n_classes
    TR = t_ref.shape[0]

    @pl.when(pl.program_id(2) == 0)
    def _():
        o_ref[...] = jnp.zeros_like(o_ref)

    def accumulate(valid):
        labels = t_ref[...].astype(jnp.int32)             # (TR, 128)

        if apply_softmax:
            # Per-pixel softmax across the small static class axis.
            m = x_ref[0].astype(jnp.float32)
            for c in range(1, C):
                m = jnp.maximum(m, x_ref[c].astype(jnp.float32))
            es = [jnp.exp(x_ref[c].astype(jnp.float32) - m) for c in range(C)]
            denom = es[0]
            for c in range(1, C):
                denom = denom + es[c]
            # One divide over (TR,128) instead of C full-size divides.
            inv = pl.reciprocal(denom, approx=False)

            def score(c):
                return es[c] * inv
        else:

            def score(c):
                return x_ref[c].astype(jnp.float32)

        # Static class loop: no (C,TR,128) iota / one-hot intermediates.
        for c in range(C):
            s_c = score(c)
            oh_c = labels == c
            if valid is not None:
                # Discard padded / out-of-range pixels (also kills softmax
                # NaN/garbage coming from undefined VMEM of a ragged block).
                s_c = jnp.where(valid, s_c, 0.0)
                oh_c = jnp.logical_and(oh_c, valid)
            inter = jnp.sum(jnp.where(oh_c, s_c, 0.0), axis=0, keepdims=True)
            zsum = jnp.sum(s_c * s_c, axis=0, keepdims=True)
            ysum = jnp.sum(oh_c.astype(jnp.float32), axis=0, keepdims=True)
            o_ref[0, pl.ds(c, 1)] += inter
            o_ref[1, pl.ds(c, 1)] += zsum
            o_ref[2, pl.ds(c, 1)] += ysum

    if needs_mask:
        gj = pl.program_id(1) * pl.num_programs(2) + pl.program_id(2)
        n_j_total = pl.num_programs(1) * pl.num_programs(2)
        is_last = gj == n_j_total - 1

        @pl.when(jnp.logical_not(is_last))
        def _():
            accumulate(None)                              # unmasked fast path

        @pl.when(is_last)
        def _():
            row = lax.broadcasted_iota(jnp.int32, (TR, _LANES), 0)
            lane = lax.broadcasted_iota(jnp.int32, (TR, _LANES), 1)
            pix = (gj * TR + row) * _LANES + lane
            accumulate(pix < hw)
    else:
        accumulate(None)


# ---------------------------------------------------------------------------
# Tiling / VMEM planning
# ---------------------------------------------------------------------------
@functools.lru_cache(maxsize=None)
def _vmem_capacity_bytes():
    try:
        info = pltpu.get_tpu_info()
        cap = getattr(info, "vmem_capacity_bytes", None)
        if cap:
            return int(cap)
    except Exception:
        pass
    return 64 * 1024 * 1024            # conservative default (v7x per-core)


def _sublane_align(itemsize):
    # Packed sub-32-bit tilings need 32 (8-bit) / 16 (16-bit) sublanes.
    return {1: 32, 2: 16}.get(int(itemsize), 8)


def _plan_tiles(n_rows, n_classes, x_itemsize, t_itemsize, tile_rows=None):
    """Pick the pixel-row tile (rows of 128 pixels per grid step) and a scoped
    VMEM limit.  Big tiles amortise the ~0.35us/step pipeline overhead; the
    cap is a generation-aware VMEM budget that includes double-buffered inputs
    plus the f32 intermediates the kernel body materialises."""
    vmem_cap = _vmem_capacity_bytes()
    row_align = max(_sublane_align(x_itemsize), _sublane_align(t_itemsize))
    in_row = _LANES * (n_classes * x_itemsize + t_itemsize)   # HBM bytes/row
    # ~4 MiB of input/step on low-VMEM high-BW chips (v7x), ~3 MiB elsewhere.
    target_in = (4 << 20) if vmem_cap <= (64 << 20) else (3 << 20)
    # VMEM/row: double-buffered input tiles + worst-case f32 intermediates.
    per_row_vmem = 2 * in_row + 4 * _LANES * (n_classes + 4)
    budget = max(4 << 20, vmem_cap // 4)
    cap_rows = max(row_align, budget // per_row_vmem)

    tr = tile_rows if tile_rows is not None else max(row_align,
                                                     target_in // in_row)
    tr = int(min(tr, cap_rows))
    if tr >= n_rows:
        tr = n_rows                    # full extent: any size is legal
    else:
        tr = max(row_align, (tr // row_align) * row_align)
        tr = min(tr, n_rows)

    footprint = (2 * tr * in_row                        # double-buffered inputs
                 + 4 * tr * _LANES * (n_classes + 4)    # f32 intermediates
                 + 2 * 3 * n_classes * _LANES * 4       # output block buffers
                 + (2 << 20))                           # misc headroom
    vmem_limit = int(min(vmem_cap * 9 // 10, max(32 << 20, footprint)))
    return tr, vmem_limit


# ---------------------------------------------------------------------------
# Wrapper
# ---------------------------------------------------------------------------
def dice_loss(inputs, target, n_classes, weight=None, softmax=False,
              tile_rows=None):
    """inputs: (B, C, H, W) scores/logits (any float dtype);
    target: (B, H, W) integer class labels."""
    B, C, H, W = inputs.shape
    assert C == n_classes, "predict and target channel count must match n_classes"
    assert n_classes > 1, "DiceLoss averages classes 1..C-1; need n_classes > 1"
    assert target.shape == (B, H, W)
    if weight is None:
        weight = [1.0] * n_classes
    weight = jnp.asarray(weight, jnp.float32)

    # Keep already-narrow integer labels (less HBM traffic); otherwise int32.
    if (jnp.issubdtype(target.dtype, jnp.integer)
            and jnp.dtype(target.dtype).itemsize <= 4):
        tgt = target
    else:
        tgt = target.astype(jnp.int32)
    t_isz = jnp.dtype(tgt.dtype).itemsize
    x_isz = jnp.dtype(inputs.dtype).itemsize

    hw = H * W
    n_rows = pl.cdiv(hw, _LANES)
    if hw % _LANES == 0:
        # Free contiguous views -- no extra HBM traffic, original dtypes kept.
        x = inputs.reshape(B, C, n_rows, _LANES)
        t = tgt.reshape(B, n_rows, _LANES)
    else:
        # Rare fallback: pad the flattened pixel axis to a multiple of 128.
        # (A prefix-slice + pure-JAX tail costs the same HBM traffic because
        # the slice also materialises, so the simpler pad is kept; the
        # in-kernel validity mask discards all padded pixels.)
        pad = n_rows * _LANES - hw
        x = jnp.pad(inputs.reshape(B, C, hw), ((0, 0), (0, 0), (0, pad)))
        x = x.reshape(B, C, n_rows, _LANES)
        t = jnp.pad(tgt.reshape(B, hw), ((0, 0), (0, pad)))
        t = t.reshape(B, n_rows, _LANES)

    tile, vmem_limit = _plan_tiles(n_rows, C, x_isz, t_isz, tile_rows)
    n_j = pl.cdiv(n_rows, tile)

    # Split the pixel-row axis when the batch alone cannot feed both v7x
    # TensorCores; only when the split divides the row blocks evenly.
    n_split = 2 if (B == 1 and n_j >= 2 and n_j % 2 == 0) else 1
    n_j_inner = n_j // n_split

    needs_mask = n_split * n_j_inner * tile * _LANES > hw

    kernel = functools.partial(
        _dice_kernel, n_classes=C, hw=hw,
        apply_softmax=bool(softmax), needs_mask=bool(needs_mask))

    partials = pl.pallas_call(
        kernel,
        out_shape=jax.ShapeDtypeStruct((B, n_split, 3, C, _LANES), jnp.float32),
        grid_spec=pltpu.PrefetchScalarGridSpec(
            num_scalar_prefetch=0,
            grid=(B, n_split, n_j_inner),
            in_specs=[
                pl.BlockSpec((None, C, tile, _LANES),
                             lambda b, s, j: (b, 0, s * n_j_inner + j, 0)),
                pl.BlockSpec((None, tile, _LANES),
                             lambda b, s, j: (b, s * n_j_inner + j, 0)),
            ],
            out_specs=pl.BlockSpec((None, None, 3, C, _LANES),
                                   lambda b, s, j: (b, s, 0, 0, 0)),
        ),
        compiler_params=pltpu.CompilerParams(
            dimension_semantics=("parallel", "parallel", "arbitrary"),
            vmem_limit_bytes=vmem_limit),
    )(x, t)

    # O(C) finishing math: per-class dice, weights, mean over classes 1..C-1.
    totals = jnp.sum(partials, axis=(0, 1, 4))            # (3, C)
    intersect, z_sum, y_sum = totals[0], totals[1], totals[2]
    dice = 1.0 - (2.0 * intersect + SMOOTH) / (z_sum + y_sum + SMOOTH)
    return jnp.sum(dice[1:] * weight[1:]) / (n_classes - 1)


# ---------------------------------------------------------------------------
# Pure-JAX reference (mirrors the PyTorch forward)
# ---------------------------------------------------------------------------
def dice_loss_ref(inputs, target, n_classes, weight=None, softmax=False):
    inputs = inputs.astype(jnp.float32)
    if softmax:
        inputs = jax.nn.softmax(inputs, axis=1)
    if weight is None:
        weight = [1.0] * n_classes
    onehot = jax.nn.one_hot(target, n_classes, axis=1, dtype=jnp.float32)
    loss = 0.0
    for i in range(1, n_classes):
        score = inputs[:, i]
        tgt = onehot[:, i]
        intersect = jnp.sum(score * tgt)
        y_sum = jnp.sum(tgt * tgt)
        z_sum = jnp.sum(score * score)
        dice = 1.0 - (2.0 * intersect + SMOOTH) / (z_sum + y_sum + SMOOTH)
        loss = loss + dice * weight[i]
    return loss / (n_classes - 1)


if __name__ == "__main__":
    key = jax.random.PRNGKey(0)
    k1, k2 = jax.random.split(key)

    def check(out, ref):
        assert jnp.allclose(out, ref, rtol=5e-4, atol=1e-5), (out, ref)

    # 1) default path (softmax=False), 128-aligned spatial size
    n_classes = 4
    B, H, W = 2, 16, 16
    x = jax.random.normal(k1, (B, n_classes, H, W), dtype=jnp.float32)
    t = jax.random.randint(k2, (B, H, W), 0, n_classes, dtype=jnp.int32)
    out = jax.block_until_ready(dice_loss(x, t, n_classes, softmax=False))
    check(out, dice_loss_ref(x, t, n_classes, softmax=False))

    # 2) softmax=True (typical segmentation usage)
    out = jax.block_until_ready(dice_loss(x, t, n_classes, softmax=True))
    check(out, dice_loss_ref(x, t, n_classes, softmax=True))

    # 3) non-128-aligned spatial size -> padded pixels + masked ragged tail
    H2, W2 = 12, 12
    x2 = jax.random.normal(k1, (B, n_classes, H2, W2), dtype=jnp.float32)
    t2 = jax.random.randint(k2, (B, H2, W2), 0, n_classes, dtype=jnp.int32)
    out = jax.block_until_ready(dice_loss(x2, t2, n_classes, softmax=True))
    check(out, dice_loss_ref(x2, t2, n_classes, softmax=True))

    # 4) B=1 with a forced small tile: exercises the pixel-split parallel
    #    axis, multi-step accumulation and the masked last tile together.
    H3, W3 = 60, 60
    x3 = jax.random.normal(k1, (1, n_classes, H3, W3), dtype=jnp.float32)
    t3 = jax.random.randint(k2, (1, H3, W3), 0, n_classes, dtype=jnp.int32)
    out = jax.block_until_ready(
        dice_loss(x3, t3, n_classes, softmax=True, tile_rows=8))
    check(out, dice_loss_ref(x3, t3, n_classes, softmax=True))

    # 5) narrow (uint8) labels, odd class count, explicit class weights
    n_c5 = 5
    w5 = [0.0, 1.0, 2.0, 0.5, 1.5]
    x5 = jax.random.normal(k1, (B, n_c5, H, W), dtype=jnp.float32)
    t5 = jax.random.randint(k2, (B, H, W), 0, n_c5).astype(jnp.uint8)
    out = jax.block_until_ready(
        dice_loss(x5, t5, n_c5, weight=w5, softmax=True))
    check(out, dice_loss_ref(x5, t5, n_c5, weight=w5, softmax=True))

    print("KERNEL_OK")
</pallas_src>

<mosaic_0001>
module attributes {stable_mosaic.version = 11 : i64} {
  func.func @_dice_kernel(%arg0: i32, %arg1: i32, %arg2: i32, %arg3: memref<1x4x2x128xf32, #tpu.memory_space<vmem>>, %arg4: memref<1x2x128xi32, #tpu.memory_space<vmem>>, %arg5: memref<1x1x3x4x128xf32, #tpu.memory_space<vmem>>) attributes {dimension_semantics = [#tpu.dimension_semantics<parallel>, #tpu.dimension_semantics<parallel>, #tpu.dimension_semantics<arbitrary>], iteration_bounds = array<i64: 2, 1, 1>, scalar_prefetch = 0 : i64, scratch_operands = 0 : i64, tpu.core_type = #tpu.core_type<tc>, window_params = [{transform_indices = @transform_0, window_bounds = array<i64: 1, 4, 2, 128>}, {transform_indices = @transform_1, window_bounds = array<i64: 1, 2, 128>}, {transform_indices = @transform_2, window_bounds = array<i64: 1, 1, 3, 4, 128>}]} {
    %c0_i32 = arith.constant 0 : i32
    %0 = arith.cmpi eq, %arg2, %c0_i32 : i32
    %1 = arith.extui %0 : i1 to i32
    %c0_i32_0 = arith.constant 0 : i32
    %2 = arith.cmpi ne, %1, %c0_i32_0 : i32
    scf.if %2 {
      %cst_152 = arith.constant 0.000000e+00 : f32
      %137 = vector.broadcast %cst_152 : f32 to vector<3x4x128xf32>
      %c0_153 = arith.constant 0 : index
      %c0_154 = arith.constant 0 : index
      %c0_155 = arith.constant 0 : index
      %c0_156 = arith.constant 0 : index
      %c0_157 = arith.constant 0 : index
      %138 = vector.load %arg5[%c0_153, %c0_154, %c0_155, %c0_156, %c0_157] : memref<1x1x3x4x128xf32, #tpu.memory_space<vmem>>, vector<1x1x3x4x128xf32>
      %139 = vector.shape_cast %138 : vector<1x1x3x4x128xf32> to vector<3x4x128xf32>
      %140 = vector.shape_cast %137 : vector<3x4x128xf32> to vector<1x1x3x4x128xf32>
      tpu.vector_store %arg5[%c0_153, %c0_154, %c0_155, %c0_156, %c0_157], %140 {strides = array<i32>} : memref<1x1x3x4x128xf32, #tpu.memory_space<vmem>>, vector<1x1x3x4x128xf32>,
    } else {
    }
    %c0 = arith.constant 0 : index
    %c0_1 = arith.constant 0 : index
    %c0_2 = arith.constant 0 : index
    %3 = vector.load %arg4[%c0, %c0_1, %c0_2] : memref<1x2x128xi32, #tpu.memory_space<vmem>>, vector<1x2x128xi32>
    %4 = vector.shape_cast %3 : vector<1x2x128xi32> to vector<2x128xi32>
    %c0_3 = arith.constant 0 : index
    %c0_4 = arith.constant 0 : index
    %c0_5 = arith.constant 0 : index
    %c0_6 = arith.constant 0 : index
    %5 = vector.load %arg3[%c0_3, %c0_4, %c0_5, %c0_6] : memref<1x4x2x128xf32, #tpu.memory_space<vmem>>, vector<1x1x2x128xf32>
    %6 = vector.shape_cast %5 : vector<1x1x2x128xf32> to vector<2x128xf32>
    %c0_i32_7 = arith.constant 0 : i32
    %7 = vector.broadcast %c0_i32_7 : i32 to vector<2x128xi32>
    %8 = arith.cmpi eq, %4, %7 : vector<2x128xi32>
    %cst = arith.constant 0.000000e+00 : f32
    %9 = vector.broadcast %cst : f32 to vector<2x128xf32>
    %10 = arith.select %8, %6, %9 : vector<2x128xi1>, vector<2x128xf32>
    %cst_8 = arith.constant dense<0.000000e+00> : vector<128xf32>
    %11 = vector.multi_reduction <add>, %10, %cst_8 [0] : vector<2x128xf32> to vector<128xf32>
    %12 = vector.shape_cast %11 : vector<128xf32> to vector<1x128xf32>
    %13 = arith.mulf %6, %6 : vector<2x128xf32>
    %cst_9 = arith.constant dense<0.000000e+00> : vector<128xf32>
    %14 = vector.multi_reduction <add>, %13, %cst_9 [0] : vector<2x128xf32> to vector<128xf32>
    %15 = vector.shape_cast %14 : vector<128xf32> to vector<1x128xf32>
    %16 = arith.extui %8 : vector<2x128xi1> to vector<2x128xi32>
    %17 = arith.sitofp %16 : vector<2x128xi32> to vector<2x128xf32>
    %cst_10 = arith.constant dense<0.000000e+00> : vector<128xf32>
    %18 = vector.multi_reduction <add>, %17, %cst_10 [0] : vector<2x128xf32> to vector<128xf32>
    %19 = vector.shape_cast %18 : vector<128xf32> to vector<1x128xf32>
    %c0_11 = arith.constant 0 : index
    %c0_12 = arith.constant 0 : index
    %c0_13 = arith.constant 0 : index
    %c0_14 = arith.constant 0 : index
    %c0_15 = arith.constant 0 : index
    %20 = vector.load %arg5[%c0_11, %c0_12, %c0_13, %c0_14, %c0_15] : memref<1x1x3x4x128xf32, #tpu.memory_space<vmem>>, vector<1x1x1x1x128xf32>
    %21 = vector.shape_cast %20 : vector<1x1x1x1x128xf32> to vector<1x128xf32>
    %22 = arith.addf %21, %12 : vector<1x128xf32>
    %c0_16 = arith.constant 0 : index
    %c0_17 = arith.constant 0 : index
    %c0_18 = arith.constant 0 : index
    %c0_19 = arith.constant 0 : index
    %c0_20 = arith.constant 0 : index
    %23 = vector.load %arg5[%c0_16, %c0_17, %c0_18, %c0_19, %c0_20] : memref<1x1x3x4x128xf32, #tpu.memory_space<vmem>>, vector<1x1x1x1x128xf32>
    %24 = vector.shape_cast %23 : vector<1x1x1x1x128xf32> to vector<1x128xf32>
    %25 = vector.shape_cast %22 : vector<1x128xf32> to vector<1x1x1x1x128xf32>
    tpu.vector_store %arg5[%c0_16, %c0_17, %c0_18, %c0_19, %c0_20], %25 {strides = array<i32>} : memref<1x1x3x4x128xf32, #tpu.memory_space<vmem>>, vector<1x1x1x1x128xf32>,
    %c0_21 = arith.constant 0 : index
    %c0_22 = arith.constant 0 : index
    %c1 = arith.constant 1 : index
    %c0_23 = arith.constant 0 : index
    %c0_24 = arith.constant 0 : index
    %26 = vector.load %arg5[%c0_21, %c0_22, %c1, %c0_23, %c0_24] : memref<1x1x3x4x128xf32, #tpu.memory_space<vmem>>, vector<1x1x1x1x128xf32>
    %27 = vector.shape_cast %26 : vector<1x1x1x1x128xf32> to vector<1x128xf32>
    %28 = arith.addf %27, %15 : vector<1x128xf32>
    %c0_25 = arith.constant 0 : index
    %c0_26 = arith.constant 0 : index
    %c1_27 = arith.constant 1 : index
    %c0_28 = arith.constant 0 : index
    %c0_29 = arith.constant 0 : index
    %29 = vector.load %arg5[%c0_25, %c0_26, %c1_27, %c0_28, %c0_29] : memref<1x1x3x4x128xf32, #tpu.memory_space<vmem>>, vector<1x1x1x1x128xf32>
    %30 = vector.shape_cast %29 : vector<1x1x1x1x128xf32> to vector<1x128xf32>
    %31 = vector.shape_cast %28 : vector<1x128xf32> to vector<1x1x1x1x128xf32>
    tpu.vector_store %arg5[%c0_25, %c0_26, %c1_27, %c0_28, %c0_29], %31 {strides = array<i32>} : memref<1x1x3x4x128xf32, #tpu.memory_space<vmem>>, vector<1x1x1x1x128xf32>,
    %c0_30 = arith.constant 0 : index
    %c0_31 = arith.constant 0 : index
    %c2 = arith.constant 2 : index
    %c0_32 = arith.constant 0 : index
    %c0_33 = arith.constant 0 : index
    %32 = vector.load %arg5[%c0_30, %c0_31, %c2, %c0_32, %c0_33] : memref<1x1x3x4x128xf32, #tpu.memory_space<vmem>>, vector<1x1x1x1x128xf32>
    %33 = vector.shape_cast %32 : vector<1x1x1x1x128xf32> to vector<1x128xf32>
    %34 = arith.addf %33, %19 : vector<1x128xf32>
    %c0_34 = arith.constant 0 : index
    %c0_35 = arith.constant 0 : index
    %c2_36 = arith.constant 2 : index
    %c0_37 = arith.constant 0 : index
    %c0_38 = arith.constant 0 : index
    %35 = vector.load %arg5[%c0_34, %c0_35, %c2_36, %c0_37, %c0_38] : memref<1x1x3x4x128xf32, #tpu.memory_space<vmem>>, vector<1x1x1x1x128xf32>
    %36 = vector.shape_cast %35 : vector<1x1x1x1x128xf32> to vector<1x128xf32>
    %37 = vector.shape_cast %34 : vector<1x128xf32> to vector<1x1x1x1x128xf32>
    tpu.vector_store %arg5[%c0_34, %c0_35, %c2_36, %c0_37, %c0_38], %37 {strides = array<i32>} : memref<1x1x3x4x128xf32, #tpu.memory_space<vmem>>, vector<1x1x1x1x128xf32>,
    %c0_39 = arith.constant 0 : index
    %c1_40 = arith.constant 1 : index
    %c0_41 = arith.constant 0 : index
    %c0_42 = arith.constant 0 : index
    %38 = vector.load %arg3[%c0_39, %c1_40, %c0_41, %c0_42] : memref<1x4x2x128xf32, #tpu.memory_space<vmem>>, vector<1x1x2x128xf32>
    %39 = vector.shape_cast %38 : vector<1x1x2x128xf32> to vector<2x128xf32>
    %c1_i32 = arith.constant 1 : i32
    %40 = vector.broadcast %c1_i32 : i32 to vector<2x128xi32>
    %41 = arith.cmpi eq, %4, %40 : vector<2x128xi32>
    %cst_43 = arith.constant 0.000000e+00 : f32
    %42 = vector.broadcast %cst_43 : f32 to vector<2x128xf32>
    %43 = arith.select %41, %39, %42 : vector<2x128xi1>, vector<2x128xf32>
    %cst_44 = arith.constant dense<0.000000e+00> : vector<128xf32>
    %44 = vector.multi_reduction <add>, %43, %cst_44 [0] : vector<2x128xf32> to vector<128xf32>
    %45 = vector.shape_cast %44 : vector<128xf32> to vector<1x128xf32>
    %46 = arith.mulf %39, %39 : vector<2x128xf32>
    %cst_45 = arith.constant dense<0.000000e+00> : vector<128xf32>
    %47 = vector.multi_reduction <add>, %46, %cst_45 [0] : vector<2x128xf32> to vector<128xf32>
    %48 = vector.shape_cast %47 : vector<128xf32> to vector<1x128xf32>
    %49 = arith.extui %41 : vector<2x128xi1> to vector<2x128xi32>
    %50 = arith.sitofp %49 : vector<2x128xi32> to vector<2x128xf32>
    %cst_46 = arith.constant dense<0.000000e+00> : vector<128xf32>
    %51 = vector.multi_reduction <add>, %50, %cst_46 [0] : vector<2x128xf32> to vector<128xf32>
    %52 = vector.shape_cast %51 : vector<128xf32> to vector<1x128xf32>
    %c0_47 = arith.constant 0 : index
    %c0_48 = arith.constant 0 : index
    %c0_49 = arith.constant 0 : index
    %c1_50 = arith.constant 1 : index
    %c0_51 = arith.constant 0 : index
    %53 = vector.load %arg5[%c0_47, %c0_48, %c0_49, %c1_50, %c0_51] : memref<1x1x3x4x128xf32, #tpu.memory_space<vmem>>, vector<1x1x1x1x128xf32>
    %54 = vector.shape_cast %53 : vector<1x1x1x1x128xf32> to vector<1x128xf32>
    %55 = arith.addf %54, %45 : vector<1x128xf32>
    %c0_52 = arith.constant 0 : index
    %c0_53 = arith.constant 0 : index
    %c0_54 = arith.constant 0 : index
    %c1_55 = arith.constant 1 : index
    %c0_56 = arith.constant 0 : index
    %56 = vector.load %arg5[%c0_52, %c0_53, %c0_54, %c1_55, %c0_56] : memref<1x1x3x4x128xf32, #tpu.memory_space<vmem>>, vector<1x1x1x1x128xf32>
    %57 = vector.shape_cast %56 : vector<1x1x1x1x128xf32> to vector<1x128xf32>
    %58 = vector.shape_cast %55 : vector<1x128xf32> to vector<1x1x1x1x128xf32>
    tpu.vector_store %arg5[%c0_52, %c0_53, %c0_54, %c1_55, %c0_56], %58 {strides = array<i32>} : memref<1x1x3x4x128xf32, #tpu.memory_space<vmem>>, vector<1x1x1x1x128xf32>,
    %c0_57 = arith.constant 0 : index
    %c0_58 = arith.constant 0 : index
    %c1_59 = arith.constant 1 : index
    %c1_60 = arith.constant 1 : index
    %c0_61 = arith.constant 0 : index
    %59 = vector.load %arg5[%c0_57, %c0_58, %c1_59, %c1_60, %c0_61] : memref<1x1x3x4x128xf32, #tpu.memory_space<vmem>>, vector<1x1x1x1x128xf32>
    %60 = vector.shape_cast %59 : vector<1x1x1x1x128xf32> to vector<1x128xf32>
    %61 = arith.addf %60, %48 : vector<1x128xf32>
    %c0_62 = arith.constant 0 : index
    %c0_63 = arith.constant 0 : index
    %c1_64 = arith.constant 1 : index
    %c1_65 = arith.constant 1 : index
    %c0_66 = arith.constant 0 : index
    %62 = vector.load %arg5[%c0_62, %c0_63, %c1_64, %c1_65, %c0_66] : memref<1x1x3x4x128xf32, #tpu.memory_space<vmem>>, vector<1x1x1x1x128xf32>
    %63 = vector.shape_cast %62 : vector<1x1x1x1x128xf32> to vector<1x128xf32>
    %64 = vector.shape_cast %61 : vector<1x128xf32> to vector<1x1x1x1x128xf32>
    tpu.vector_store %arg5[%c0_62, %c0_63, %c1_64, %c1_65, %c0_66], %64 {strides = array<i32>} : memref<1x1x3x4x128xf32, #tpu.memory_space<vmem>>, vector<1x1x1x1x128xf32>,
    %c0_67 = arith.constant 0 : index
    %c0_68 = arith.constant 0 : index
    %c2_69 = arith.constant 2 : index
    %c1_70 = arith.constant 1 : index
    %c0_71 = arith.constant 0 : index
    %65 = vector.load %arg5[%c0_67, %c0_68, %c2_69, %c1_70, %c0_71] : memref<1x1x3x4x128xf32, #tpu.memory_space<vmem>>, vector<1x1x1x1x128xf32>
    %66 = vector.shape_cast %65 : vector<1x1x1x1x128xf32> to vector<1x128xf32>
    %67 = arith.addf %66, %52 : vector<1x128xf32>
    %c0_72 = arith.constant 0 : index
    %c0_73 = arith.constant 0 : index
    %c2_74 = arith.constant 2 : index
    %c1_75 = arith.constant 1 : index
    %c0_76 = arith.constant 0 : index
    %68 = vector.load %arg5[%c0_72, %c0_73, %c2_74, %c1_75, %c0_76] : memref<1x1x3x4x128xf32, #tpu.memory_space<vmem>>, vector<1x1x1x1x128xf32>
    %69 = vector.shape_cast %68 : vector<1x1x1x1x128xf32> to vector<1x128xf32>
    %70 = vector.shape_cast %67 : vector<1x128xf32> to vector<1x1x1x1x128xf32>
    tpu.vector_store %arg5[%c0_72, %c0_73, %c2_74, %c1_75, %c0_76], %70 {strides = array<i32>} : memref<1x1x3x4x128xf32, #tpu.memory_space<vmem>>, vector<1x1x1x1x128xf32>,
    %c0_77 = arith.constant 0 : index
    %c2_78 = arith.constant 2 : index
    %c0_79 = arith.constant 0 : index
    %c0_80 = arith.constant 0 : index
    %71 = vector.load %arg3[%c0_77, %c2_78, %c0_79, %c0_80] : memref<1x4x2x128xf32, #tpu.memory_space<vmem>>, vector<1x1x2x128xf32>
    %72 = vector.shape_cast %71 : vector<1x1x2x128xf32> to vector<2x128xf32>
    %c2_i32 = arith.constant 2 : i32
    %73 = vector.broadcast %c2_i32 : i32 to vector<2x128xi32>
    %74 = arith.cmpi eq, %4, %73 : vector<2x128xi32>
    %cst_81 = arith.constant 0.000000e+00 : f32
    %75 = vector.broadcast %cst_81 : f32 to vector<2x128xf32>
    %76 = arith.select %74, %72, %75 : vector<2x128xi1>, vector<2x128xf32>
    %cst_82 = arith.constant dense<0.000000e+00> : vector<128xf32>
    %77 = vector.multi_reduction <add>, %76, %cst_82 [0] : vector<2x128xf32> to vector<128xf32>
    %78 = vector.shape_cast %77 : vector<128xf32> to vector<1x128xf32>
    %79 = arith.mulf %72, %72 : vector<2x128xf32>
    %cst_83 = arith.constant dense<0.000000e+00> : vector<128xf32>
    %80 = vector.multi_reduction <add>, %79, %cst_83 [0] : vector<2x128xf32> to vector<128xf32>
    %81 = vector.shape_cast %80 : vector<128xf32> to vector<1x128xf32>
    %82 = arith.extui %74 : vector<2x128xi1> to vector<2x128xi32>
    %83 = arith.sitofp %82 : vector<2x128xi32> to vector<2x128xf32>
    %cst_84 = arith.constant dense<0.000000e+00> : vector<128xf32>
    %84 = vector.multi_reduction <add>, %83, %cst_84 [0] : vector<2x128xf32> to vector<128xf32>
    %85 = vector.shape_cast %84 : vector<128xf32> to vector<1x128xf32>
    %c0_85 = arith.constant 0 : index
    %c0_86 = arith.constant 0 : index
    %c0_87 = arith.constant 0 : index
    %c2_88 = arith.constant 2 : index
    %c0_89 = arith.constant 0 : index
    %86 = vector.load %arg5[%c0_85, %c0_86, %c0_87, %c2_88, %c0_89] : memref<1x1x3x4x128xf32, #tpu.memory_space<vmem>>, vector<1x1x1x1x128xf32>
    %87 = vector.shape_cast %86 : vector<1x1x1x1x128xf32> to vector<1x128xf32>
    %88 = arith.addf %87, %78 : vector<1x128xf32>
    %c0_90 = arith.constant 0 : index
    %c0_91 = arith.constant 0 : index
    %c0_92 = arith.constant 0 : index
    %c2_93 = arith.constant 2 : index
    %c0_94 = arith.constant 0 : index
    %89 = vector.load %arg5[%c0_90, %c0_91, %c0_92, %c2_93, %c0_94] : memref<1x1x3x4x128xf32, #tpu.memory_space<vmem>>, vector<1x1x1x1x128xf32>
    %90 = vector.shape_cast %89 : vector<1x1x1x1x128xf32> to vector<1x128xf32>
    %91 = vector.shape_cast %88 : vector<1x128xf32> to vector<1x1x1x1x128xf32>
    tpu.vector_store %arg5[%c0_90, %c0_91, %c0_92, %c2_93, %c0_94], %91 {strides = array<i32>} : memref<1x1x3x4x128xf32, #tpu.memory_space<vmem>>, vector<1x1x1x1x128xf32>,
    %c0_95 = arith.constant 0 : index
    %c0_96 = arith.constant 0 : index
    %c1_97 = arith.constant 1 : index
    %c2_98 = arith.constant 2 : index
    %c0_99 = arith.constant 0 : index
    %92 = vector.load %arg5[%c0_95, %c0_96, %c1_97, %c2_98, %c0_99] : memref<1x1x3x4x128xf32, #tpu.memory_space<vmem>>, vector<1x1x1x1x128xf32>
    %93 = vector.shape_cast %92 : vector<1x1x1x1x128xf32> to vector<1x128xf32>
    %94 = arith.addf %93, %81 : vector<1x128xf32>
    %c0_100 = arith.constant 0 : index
    %c0_101 = arith.constant 0 : index
    %c1_102 = arith.constant 1 : index
    %c2_103 = arith.constant 2 : index
    %c0_104 = arith.constant 0 : index
    %95 = vector.load %arg5[%c0_100, %c0_101, %c1_102, %c2_103, %c0_104] : memref<1x1x3x4x128xf32, #tpu.memory_space<vmem>>, vector<1x1x1x1x128xf32>
    %96 = vector.shape_cast %95 : vector<1x1x1x1x128xf32> to vector<1x128xf32>
    %97 = vector.shape_cast %94 : vector<1x128xf32> to vector<1x1x1x1x128xf32>
    tpu.vector_store %arg5[%c0_100, %c0_101, %c1_102, %c2_103, %c0_104], %97 {strides = array<i32>} : memref<1x1x3x4x128xf32, #tpu.memory_space<vmem>>, vector<1x1x1x1x128xf32>,
    %c0_105 = arith.constant 0 : index
    %c0_106 = arith.constant 0 : index
    %c2_107 = arith.constant 2 : index
    %c2_108 = arith.constant 2 : index
    %c0_109 = arith.constant 0 : index
    %98 = vector.load %arg5[%c0_105, %c0_106, %c2_107, %c2_108, %c0_109] : memref<1x1x3x4x128xf32, #tpu.memory_space<vmem>>, vector<1x1x1x1x128xf32>
    %99 = vector.shape_cast %98 : vector<1x1x1x1x128xf32> to vector<1x128xf32>
    %100 = arith.addf %99, %85 : vector<1x128xf32>
    %c0_110 = arith.constant 0 : index
    %c0_111 = arith.constant 0 : index
    %c2_112 = arith.constant 2 : index
    %c2_113 = arith.constant 2 : index
    %c0_114 = arith.constant 0 : index
    %101 = vector.load %arg5[%c0_110, %c0_111, %c2_112, %c2_113, %c0_114] : memref<1x1x3x4x128xf32, #tpu.memory_space<vmem>>, vector<1x1x1x1x128xf32>
    %102 = vector.shape_cast %101 : vector<1x1x1x1x128xf32> to vector<1x128xf32>
    %103 = vector.shape_cast %100 : vector<1x128xf32> to vector<1x1x1x1x128xf32>
    tpu.vector_store %arg5[%c0_110, %c0_111, %c2_112, %c2_113, %c0_114], %103 {strides = array<i32>} : memref<1x1x3x4x128xf32, #tpu.memory_space<vmem>>, vector<1x1x1x1x128xf32>,
    %c0_115 = arith.constant 0 : index
    %c3 = arith.constant 3 : index
    %c0_116 = arith.constant 0 : index
    %c0_117 = arith.constant 0 : index
    %104 = vector.load %arg3[%c0_115, %c3, %c0_116, %c0_117] : memref<1x4x2x128xf32, #tpu.memory_space<vmem>>, vector<1x1x2x128xf32>
    %105 = vector.shape_cast %104 : vector<1x1x2x128xf32> to vector<2x128xf32>
    %c3_i32 = arith.constant 3 : i32
    %106 = vector.broadcast %c3_i32 : i32 to vector<2x128xi32>
    %107 = arith.cmpi eq, %4, %106 : vector<2x128xi32>
    %cst_118 = arith.constant 0.000000e+00 : f32
    %108 = vector.broadcast %cst_118 : f32 to vector<2x128xf32>
    %109 = arith.select %107, %105, %108 : vector<2x128xi1>, vector<2x128xf32>
    %cst_119 = arith.constant dense<0.000000e+00> : vector<128xf32>
    %110 = vector.multi_reduction <add>, %109, %cst_119 [0] : vector<2x128xf32> to vector<128xf32>
    %111 = vector.shape_cast %110 : vector<128xf32> to vector<1x128xf32>
    %112 = arith.mulf %105, %105 : vector<2x128xf32>
    %cst_120 = arith.constant dense<0.000000e+00> : vector<128xf32>
    %113 = vector.multi_reduction <add>, %112, %cst_120 [0] : vector<2x128xf32> to vector<128xf32>
    %114 = vector.shape_cast %113 : vector<128xf32> to vector<1x128xf32>
    %115 = arith.extui %107 : vector<2x128xi1> to vector<2x128xi32>
    %116 = arith.sitofp %115 : vector<2x128xi32> to vector<2x128xf32>
    %cst_121 = arith.constant dense<0.000000e+00> : vector<128xf32>
    %117 = vector.multi_reduction <add>, %116, %cst_121 [0] : vector<2x128xf32> to vector<128xf32>
    %118 = vector.shape_cast %117 : vector<128xf32> to vector<1x128xf32>
    %c0_122 = arith.constant 0 : index
    %c0_123 = arith.constant 0 : index
    %c0_124 = arith.constant 0 : index
    %c3_125 = arith.constant 3 : index
    %c0_126 = arith.constant 0 : index
    %119 = vector.load %arg5[%c0_122, %c0_123, %c0_124, %c3_125, %c0_126] : memref<1x1x3x4x128xf32, #tpu.memory_space<vmem>>, vector<1x1x1x1x128xf32>
    %120 = vector.shape_cast %119 : vector<1x1x1x1x128xf32> to vector<1x128xf32>
    %121 = arith.addf %120, %111 : vector<1x128xf32>
    %c0_127 = arith.constant 0 : index
    %c0_128 = arith.constant 0 : index
    %c0_129 = arith.constant 0 : index
    %c3_130 = arith.constant 3 : index
    %c0_131 = arith.constant 0 : index
    %122 = vector.load %arg5[%c0_127, %c0_128, %c0_129, %c3_130, %c0_131] : memref<1x1x3x4x128xf32, #tpu.memory_space<vmem>>, vector<1x1x1x1x128xf32>
    %123 = vector.shape_cast %122 : vector<1x1x1x1x128xf32> to vector<1x128xf32>
    %124 = vector.shape_cast %121 : vector<1x128xf32> to vector<1x1x1x1x128xf32>
    tpu.vector_store %arg5[%c0_127, %c0_128, %c0_129, %c3_130, %c0_131], %124 {strides = array<i32>} : memref<1x1x3x4x128xf32, #tpu.memory_space<vmem>>, vector<1x1x1x1x128xf32>,
    %c0_132 = arith.constant 0 : index
    %c0_133 = arith.constant 0 : index
    %c1_134 = arith.constant 1 : index
    %c3_135 = arith.constant 3 : index
    %c0_136 = arith.constant 0 : index
    %125 = vector.load %arg5[%c0_132, %c0_133, %c1_134, %c3_135, %c0_136] : memref<1x1x3x4x128xf32, #tpu.memory_space<vmem>>, vector<1x1x1x1x128xf32>
    %126 = vector.shape_cast %125 : vector<1x1x1x1x128xf32> to vector<1x128xf32>
    %127 = arith.addf %126, %114 : vector<1x128xf32>
    %c0_137 = arith.constant 0 : index
    %c0_138 = arith.constant 0 : index
    %c1_139 = arith.constant 1 : index
    %c3_140 = arith.constant 3 : index
    %c0_141 = arith.constant 0 : index
    %128 = vector.load %arg5[%c0_137, %c0_138, %c1_139, %c3_140, %c0_141] : memref<1x1x3x4x128xf32, #tpu.memory_space<vmem>>, vector<1x1x1x1x128xf32>
    %129 = vector.shape_cast %128 : vector<1x1x1x1x128xf32> to vector<1x128xf32>
    %130 = vector.shape_cast %127 : vector<1x128xf32> to vector<1x1x1x1x128xf32>
    tpu.vector_store %arg5[%c0_137, %c0_138, %c1_139, %c3_140, %c0_141], %130 {strides = array<i32>} : memref<1x1x3x4x128xf32, #tpu.memory_space<vmem>>, vector<1x1x1x1x128xf32>,
    %c0_142 = arith.constant 0 : index
    %c0_143 = arith.constant 0 : index
    %c2_144 = arith.constant 2 : index
    %c3_145 = arith.constant 3 : index
    %c0_146 = arith.constant 0 : index
    %131 = vector.load %arg5[%c0_142, %c0_143, %c2_144, %c3_145, %c0_146] : memref<1x1x3x4x128xf32, #tpu.memory_space<vmem>>, vector<1x1x1x1x128xf32>
    %132 = vector.shape_cast %131 : vector<1x1x1x1x128xf32> to vector<1x128xf32>
    %133 = arith.addf %132, %118 : vector<1x128xf32>
    %c0_147 = arith.constant 0 : index
    %c0_148 = arith.constant 0 : index
    %c2_149 = arith.constant 2 : index
    %c3_150 = arith.constant 3 : index
    %c0_151 = arith.constant 0 : index
    %134 = vector.load %arg5[%c0_147, %c0_148, %c2_149, %c3_150, %c0_151] : memref<1x1x3x4x128xf32, #tpu.memory_space<vmem>>, vector<1x1x1x1x128xf32>
    %135 = vector.shape_cast %134 : vector<1x1x1x1x128xf32> to vector<1x128xf32>
    %136 = vector.shape_cast %133 : vector<1x128xf32> to vector<1x1x1x1x128xf32>
    tpu.vector_store %arg5[%c0_147, %c0_148, %c2_149, %c3_150, %c0_151], %136 {strides = array<i32>} : memref<1x1x3x4x128xf32, #tpu.memory_space<vmem>>, vector<1x1x1x1x128xf32>,
    return
  }
  func.func @transform_0(%arg0: i32, %arg1: i32, %arg2: i32) -> (i32, i32, i32, i32) {
    %c1_i32 = arith.constant 1 : i32
    %0 = arith.muli %arg1, %c1_i32 : i32
    %1 = arith.addi %0, %arg2 : i32
    %c0_i32 = arith.constant 0 : i32
    %c0_i32_0 = arith.constant 0 : i32
    %c0_i32_1 = arith.constant 0 : i32
    return %arg0, %c0_i32, %1, %c0_i32_0 : i32, i32, i32, i32
  }
  func.func @transform_1(%arg0: i32, %arg1: i32, %arg2: i32) -> (i32, i32, i32) {
    %c1_i32 = arith.constant 1 : i32
    %0 = arith.muli %arg1, %c1_i32 : i32
    %1 = arith.addi %0, %arg2 : i32
    %c0_i32 = arith.constant 0 : i32
    %c0_i32_0 = arith.constant 0 : i32
    return %arg0, %1, %c0_i32 : i32, i32, i32
  }
  func.func @transform_2(%arg0: i32, %arg1: i32, %arg2: i32) -> (i32, i32, i32, i32, i32) {
    %c0_i32 = arith.constant 0 : i32
    %c0_i32_0 = arith.constant 0 : i32
    %c0_i32_1 = arith.constant 0 : i32
    %c0_i32_2 = arith.constant 0 : i32
    return %arg0, %arg1, %c0_i32, %c0_i32_0, %c0_i32_1 : i32, i32, i32, i32, i32
  }
}

</mosaic_0001>

<llo_original>
// kernel: tpu_custom_call.1
$region0: #{tpu_custom_call.1}
  #allocation0 [shape = 'u32[]', space=smem, size = 0x4, offset = 0x4, fixed_abs, tag = 'smem constant byte address 0x4 - core index']
  #allocation1 [shape = 'u32[144,128]{1,0:T(1,128)}', space=vmem, size = 0x12000, scoped, tag = 'internal scratch']
  %s0 = inlined_call_operand.hbm [shape: f32[2,4,2,128], index: 0, kind: input, shape index: {}]
  %s1 = inlined_call_operand.hbm [shape: s32[2,2,128], index: 1, kind: input, shape index: {}]
  %s2 = inlined_call_operand.hbm [shape: f32[2,1,3,4,128], index: 2, kind: output, shape index: {}]
  %s3 = sld [smem:[#allocation0]]
  $region53: #{tpu_custom_call.1} parent=0
    _
  %s5 = ssub.s32 1, %s3
  %s6 = scalar_select 0, %s5, %s3
  $region1: #{tpu_custom_call.1} parent=0
    #allocation2 [shape = 'u8[8192]{0}', space=vmem, size = 0x2000, scoped, tag = 'input window, operand 0']
    #allocation3 [shape = 's32[2]{0}', space=sflag, size = 0x8, scoped, tag = 'scoped memory for tpu_custom_call.1']
    #allocation4 [shape = 's32[2]{0}', space=sflag, size = 0x8, scoped, tag = 'scoped memory for tpu_custom_call.1']
    #allocation5 [shape = 'u8[2048]{0}', space=vmem, size = 0x800, scoped, tag = 'input window, operand 1']
    #allocation6 [shape = 's32[2]{0}', space=sflag, size = 0x8, scoped, tag = 'scoped memory for tpu_custom_call.1']
    #allocation7 [shape = 'u8[12288]{0}', space=vmem, size = 0x3000, scoped, tag = 'output window, operand 0']
    %7 = vsyncpa [#allocation3], 0
    %s8 = scalar_lea.sflag [#allocation3], 1
    %9 = vsyncpa %s8, 0
    %10 = vsyncpa [#allocation6], 0
    %s11 = scalar_lea.sflag [#allocation6], 1
    %12 = vsyncpa %s11, 0
    %13 = vsyncpa [#allocation4], 0
    %s14 = scalar_lea.sflag [#allocation4], 1
    %15 = vsyncpa %s14, 0
    loop: start=0, step=1, limit=4
    $region2: #{tpu_custom_call.1} parent=1 // loop_pre_header
      _
    $region3: #{tpu_custom_call.1} parent=1 // loop_header
      %s17 = sphi 0, %s21
      %p18 = scmp.ge.s32.totalorder %s17, 4
      %s24 = sphi 0, %s43
      %s25 = sphi 0, %s39
      %s26 = sphi 0, %s35
      %s27 = sphi 0, %s24
      %s28 = sphi 0, %s25
      %s29 = sphi 0, %s26
      %s30 = sphi 0, %s27
      %s31 = sphi 0, %s28
      %s32 = sphi 0, %s29
      %s50 = sphi 0, %s52
      %s53 = sphi 0, %s50
      %s54 = sphi 0, %s53
      %s70 = sphi 0, %s54
      %s80 = sphi 0, %s82
      %s83 = sphi 0, %s80
      %s84 = sphi 0, %s83
      %s100 = sphi 0, %s84
      %s108 = sphi 0, %s110
      %s111 = sphi 0, %s108
      %s112 = sphi 0, %s111
      %s128 = sphi 0, %s112
    $region4: #{tpu_custom_call.1} parent=1 // loop_header_branch
      %20 = sbr.rel (%p18) target = $region8
    $region5: #{tpu_custom_call.1} parent=1 // loop_body
      %s22 = ssub.s32 %s17, 1
      %s23 = ssub.s32 %s17, 2
      %s33 = sadd.s32 1, %s26
      %p34 = scmp.ge.s32.totalorder %s33, 1
      %s35 = scalar_select %p34, 0, %s33
      %s36 = sadd.s32 1, %s25
      %s37 = scalar_select %p34, %s36, %s25
      %p38 = scmp.ge.s32.totalorder %s37, 1
      %s39 = scalar_select %p38, 0, %s37
      %s40 = sadd.s32 1, %s24
      %s41 = scalar_select %p38, %s40, %s24
      %p42 = scmp.ge.s32.totalorder %s41, 2
      %s43 = scalar_select %p42, 0, %s41
      %s44 = sadd.s32 %s25, %s26
      %s45 = sadd.s32 %s39, %s35
      %s46 = ssub.s32 %s24, %s43
      %s47 = ssub.s32 %s44, %s45
      %s48 = sor.u32 %s46, %s47
      %p49 = scmp.eq.s32.totalorder %s48, 0
      %s51 = sadd.s32 %s50, 1
      %s52 = scalar_select %p49, %s50, %s51
      %p55 = pneg %p49
      %p56 = scmp.eq.s32.totalorder %s17, 1
      %p57 = por %p55, %p56
      %p58 = scmp.ne.s32.totalorder %s50, %s53
      %p59 = scmp.eq.s32.totalorder %s17, 0
      %p60 = por %p58, %p59
      %p61 = scmp.ne.s32.totalorder %s50, %s53
      %p62 = scmp.eq.s32.totalorder %s22, 1
      %p63 = por %p61, %p62
      %p64 = scmp.ne.s32.totalorder %s53, %s54
      %p65 = scmp.eq.s32.totalorder %s22, 0
      %p66 = por %p64, %p65
      %p67 = scmp.ne.s32.totalorder %s53, %s54
      %p68 = scmp.eq.s32.totalorder %s23, 1
      %p69 = por %p67, %p68
      %p71 = scmp.ne.s32.totalorder %s54, %s70
      %p72 = scmp.eq.s32.totalorder %s23, 0
      %p73 = por %p71, %p72
      %s74 = sadd.s32 %s25, %s26
      %s75 = sadd.s32 %s39, %s35
      %s76 = ssub.s32 %s24, %s43
      %s77 = ssub.s32 %s74, %s75
      %s78 = sor.u32 %s76, %s77
      %p79 = scmp.eq.s32.totalorder %s78, 0
      %s81 = sadd.s32 %s80, 1
      %s82 = scalar_select %p79, %s80, %s81
      %p85 = pneg %p79
      %p86 = scmp.eq.s32.totalorder %s17, 1
      %p87 = por %p85, %p86
      %p88 = scmp.ne.s32.totalorder %s80, %s83
      %p89 = scmp.eq.s32.totalorder %s17, 0
      %p90 = por %p88, %p89
      %p91 = scmp.ne.s32.totalorder %s80, %s83
      %p92 = scmp.eq.s32.totalorder %s22, 1
      %p93 = por %p91, %p92
      %p94 = scmp.ne.s32.totalorder %s83, %s84
      %p95 = scmp.eq.s32.totalorder %s22, 0
      %p96 = por %p94, %p95
      %p97 = scmp.ne.s32.totalorder %s83, %s84
      %p98 = scmp.eq.s32.totalorder %s23, 1
      %p99 = por %p97, %p98
      %p101 = scmp.ne.s32.totalorder %s84, %s100
      %p102 = scmp.eq.s32.totalorder %s23, 0
      %p103 = por %p101, %p102
      %s104 = ssub.s32 %s24, %s43
      %s105 = ssub.s32 %s25, %s39
      %s106 = sor.u32 %s104, %s105
      %p107 = scmp.eq.s32.totalorder %s106, 0
      %s109 = sadd.s32 %s108, 1
      %s110 = scalar_select %p107, %s108, %s109
      %p113 = pneg %p107
      %p114 = scmp.eq.s32.totalorder %s17, 1
      %p115 = por %p113, %p114
      %p116 = scmp.ne.s32.totalorder %s108, %s111
      %p117 = scmp.eq.s32.totalorder %s17, 0
      %p118 = por %p116, %p117
      %p119 = scmp.ne.s32.totalorder %s108, %s111
      %p120 = scmp.eq.s32.totalorder %s22, 1
      %p121 = por %p119, %p120
      %p122 = scmp.ne.s32.totalorder %s111, %s112
      %p123 = scmp.eq.s32.totalorder %s22, 0
      %p124 = por %p122, %p123
      %p125 = scmp.ne.s32.totalorder %s111, %s112
      %p126 = scmp.eq.s32.totalorder %s23, 1
      %p127 = por %p125, %p126
      %p129 = scmp.ne.s32.totalorder %s112, %s128
      %p130 = scmp.eq.s32.totalorder %s23, 0
      %p131 = por %p129, %p130
      %p132 = scmp.le.s32.totalorder 1, %s17
      %p133 = scmp.lt.s32.totalorder %s17, 3
      %p134 = pnand %p132, %p133
      %p135 = pneg %p134
      // Predicated region
      $region9: #{tpu_custom_call.1} parent=5 // pred_check
        _
      $region10: #{tpu_custom_call.1} parent=5 // pred_check_branch
        %137 = sbr.rel (%p134) target = $region12
      $region11: #{tpu_custom_call.1} parent=5 // pred_region
        %s138 = ssub.s32 %s17, 1
      $region12: #{tpu_custom_call.1} parent=5 // pred_fallthru
        _
      %p139 = scmp.lt.s32.totalorder %s17, 2
      // Predicated region
      $region13: #{tpu_custom_call.1} parent=5 // pred_check
        %p140 = pneg %p139
      $region14: #{tpu_custom_call.1} parent=5 // pred_check_branch
        %142 = sbr.rel (%p140) target = $region16
      $region15: #{tpu_custom_call.1} parent=5 // pred_region
        // Predicated region
        $region17: #{tpu_custom_call.1} parent=15 // pred_check
          %p143 = pneg %p60
        $region18: #{tpu_custom_call.1} parent=15 // pred_check_branch
          %145 = sbr.rel (%p143) target = $region20
        $region19: #{tpu_custom_call.1} parent=15 // pred_region
          %s146 = sand.u32 %s50, 1
          %s147 = scalar_lea.sflag [#allocation3], %s146
          %s148 = sand.u32 %s50, 1
          %s149 = smul.addr %s148, 8
          %s150 = scalar_lea.vmem [#allocation2], %s149
          %s151 = sadd.s32 %s25, %s26
          %s153 = ssub.s32 128, 128
          %154 = vsyncadd %s147, %s153
          %s155 = smul.addr %s24, 4
          %s156 = sadd.s32 %s151, %s155
          %s157 = smul.addr %s156, 32
          %s158 = scalar_lea.hbm %s0, %s157
          %s159 = sshll.u32 %s150, 4
          %s160 = int_to_ptr.vmem [resolvable:$true] %s159
          %165 = dma.hbm_to_vmem [thread:$0]  %s158, 128, %s160, %s147, 32, 32, 2
        $region20: #{tpu_custom_call.1} parent=15 // pred_fallthru
          _
        // Predicated region
        $region21: #{tpu_custom_call.1} parent=15 // pred_check
          %p166 = pneg %p90
        $region22: #{tpu_custom_call.1} parent=15 // pred_check_branch
          %168 = sbr.rel (%p166) target = $region24
        $region23: #{tpu_custom_call.1} parent=15 // pred_region
          %s169 = sand.u32 %s80, 1
          %s170 = scalar_lea.sflag [#allocation6], %s169
          %s171 = sand.u32 %s80, 1
          %s172 = smul.addr %s171, 2
          %s173 = scalar_lea.vmem [#allocation5], %s172
          %s174 = sadd.s32 %s25, %s26
          %s176 = ssub.s32 32, 32
          %177 = vsyncadd %s170, %s176
          %s178 = sadd.s32 %s174, %s24
          %s179 = smul.addr %s178, 32
          %s180 = scalar_lea.hbm %s1, %s179
          %s182 = sshll.u32 %s173, 4
          %s183 = int_to_ptr.vmem [resolvable:$true] %s182
          %185 = dma.hbm_to_vmem [thread:$0]  %s180, 32, %s183, %s170
        $region24: #{tpu_custom_call.1} parent=15 // pred_fallthru
          _
      $region16: #{tpu_custom_call.1} parent=5 // pred_fallthru
        _
      %p186 = scmp.le.s32.totalorder 1, %s17
      %p187 = scmp.lt.s32.totalorder %s17, 3
      %p188 = pnand %p186, %p187
      %p189 = pneg %p188
      // Predicated region
      $region25: #{tpu_custom_call.1} parent=5 // pred_check
        _
      $region26: #{tpu_custom_call.1} parent=5 // pred_check_branch
        %191 = sbr.rel (%p188) target = $region28
      $region27: #{tpu_custom_call.1} parent=5 // pred_region
        %s192 = ssub.s32 %s17, 1
        %s193 = sand.u32 %s53, 1
        %s194 = scalar_lea.sflag [#allocation3], %s193
        %s195 = sand.u32 %s53, 1
        %s196 = smul.addr %s195, 8
        %s197 = scalar_lea.vmem [#allocation2], %s196
        // Predicated region
        $region29: #{tpu_custom_call.1} parent=27 // pred_check
          %p198 = pneg %p66
        $region30: #{tpu_custom_call.1} parent=27 // pred_check_branch
          %200 = sbr.rel (%p198) target = $region32
        $region31: #{tpu_custom_call.1} parent=27 // pred_region
          %201 = dma.done %s194, 128
        $region32: #{tpu_custom_call.1} parent=27 // pred_fallthru
          _
        %s202 = sand.u32 %s83, 1
        %s203 = scalar_lea.sflag [#allocation6], %s202
        %s204 = sand.u32 %s83, 1
        %s205 = smul.addr %s204, 2
        %s206 = scalar_lea.vmem [#allocation5], %s205
        // Predicated region
        $region33: #{tpu_custom_call.1} parent=27 // pred_check
          %p207 = pneg %p96
        $region34: #{tpu_custom_call.1} parent=27 // pred_check_branch
          %209 = sbr.rel (%p207) target = $region36
        $region35: #{tpu_custom_call.1} parent=27 // pred_region
          %210 = dma.done %s203, 32
        $region36: #{tpu_custom_call.1} parent=27 // pred_fallthru
          _
        %s211 = sand.u32 %s53, 1
        %s212 = scalar_lea.sflag [#allocation3], %s211
        %s213 = sand.u32 %s53, 1
        %s214 = smul.addr %s213, 8
        %s215 = scalar_lea.vmem [#allocation2], %s214
        %p216 = pneg %p66
        %p217 = pneg %p63
        %s218 = sand.u32 %s83, 1
        %s219 = scalar_lea.sflag [#allocation6], %s218
        %s220 = sand.u32 %s83, 1
        %s221 = smul.addr %s220, 2
        %s222 = scalar_lea.vmem [#allocation5], %s221
        %p223 = pneg %p96
        %p224 = pneg %p93
        %p225 = pneg %p124
        %p226 = pneg %p121
        %s227 = sand.u32 %s111, 1
        %s228 = scalar_lea.sflag [#allocation4], %s227
        %s229 = sand.u32 %s111, 1
        %s230 = smul.addr %s229, 12
        %s231 = scalar_lea.vmem [#allocation7], %s230
        %s232 = sadd.s32 %s28, %s29
        %s233 = sadd.s32 %s28, %s29
        %p234 = scmp.eq.s32.totalorder %s29, 0
        // Predicated region
        $region37: #{tpu_custom_call.1} parent=27 // pred_check
          %p235 = pneg %p234
        $region38: #{tpu_custom_call.1} parent=27 // pred_check_branch
          %237 = sbr.rel (%p235) target = $region40
        $region39: #{tpu_custom_call.1} parent=27 // pred_region
          %238 = vst [vmem:[%s231] sm:$0xf] 0.0
          %239 = vst [vmem:[%s231 + $0x4] sm:$0xf] 0.0
          %240 = vst [vmem:[%s231 + $0x8] sm:$0xf] 0.0
        $region40: #{tpu_custom_call.1} parent=27 // pred_fallthru
          _
        %v241 = vld [vmem:[%s206] sm:$0x3]
        %v242 = vld [vmem:[%s197] sm:$0x3]
        %vm243 = vcmp.eq.s32.totalorder %v241, 0
        %v244 = vsel %vm243, %v242, 0.0
        %vm245 = vcmask 1041408
        %v246 = vsel %vm245, %v244, 0.0
        %v247 = vrot.slane %v246, 4
        %v248 = vadd.f32 %v246, %v247
        %v249 = vrot.slane %v248, 2
        %v250 = vadd.f32 %v248, %v249
        %v251 = vrot.slane %v250, 1
        %v252 = vadd.f32 %v250, %v251
        %v253 = vmul.f32 %v242, %v242
        %v254 = vsel %vm245, %v253, 0.0
        %v255 = vrot.slane %v254, 4
        %v256 = vadd.f32 %v254, %v255
        %v257 = vrot.slane %v256, 2
        %v258 = vadd.f32 %v256, %v257
        %v259 = vrot.slane %v258, 1
        %v260 = vadd.f32 %v258, %v259
        %v261 = vsel %vm243, 1, 0
        %v262 = vcvt.s32.f32 %v261
        %v263 = vsel %vm245, %v262, 0.0
        %v264 = vrot.slane %v263, 4
        %v265 = vadd.f32 %v263, %v264
        %v266 = vrot.slane %v265, 2
        %v267 = vadd.f32 %v265, %v266
        %v268 = vrot.slane %v267, 1
        %v269 = vadd.f32 %v267, %v268
        %v270 = vld [vmem:[%s231] sm:$0x1]
        %v271 = vadd.f32 %v270, %v252
        %272 = vst [vmem:[%s231] sm:$0x1] %v271
        %s273 = scalar_lea.vmem %s231, 4 [#allocation7]
        %v274 = vld [vmem:[%s273] sm:$0x1]
        %v275 = vadd.f32 %v274, %v260
        %276 = vst [vmem:[%s273] sm:$0x1] %v275
        %s277 = scalar_lea.vmem %s231, 8 [#allocation7]
        %v278 = vld [vmem:[%s277] sm:$0x1]
        %v279 = vadd.f32 %v278, %v269
        %280 = vst [vmem:[%s277] sm:$0x1] %v279
        %s281 = scalar_lea.vmem %s197, 2 [#allocation2]
        %v282 = vld [vmem:[%s281] sm:$0x3]
        %vm283 = vcmp.eq.s32.totalorder %v241, 1
        %v284 = vsel %vm283, %v282, 0.0
        %v285 = vsel %vm245, %v284, 0.0
        %v286 = vrot.slane %v285, 4
        %v287 = vadd.f32 %v285, %v286
        %v288 = vrot.slane %v287, 2
        %v289 = vadd.f32 %v287, %v288
        %v290 = vrot.slane %v289, 1
        %v291 = vadd.f32 %v289, %v290
        %v292 = vmul.f32 %v282, %v282
        %v293 = vsel %vm245, %v292, 0.0
        %v294 = vrot.slane %v293, 4
        %v295 = vadd.f32 %v293, %v294
        %v296 = vrot.slane %v295, 2
        %v297 = vadd.f32 %v295, %v296
        %v298 = vrot.slane %v297, 1
        %v299 = vadd.f32 %v297, %v298
        %v300 = vsel %vm283, 1, 0
        %v301 = vcvt.s32.f32 %v300
        %v302 = vsel %vm245, %v301, 0.0
        %v303 = vrot.slane %v302, 4
        %v304 = vadd.f32 %v302, %v303
        %v305 = vrot.slane %v304, 2
        %v306 = vadd.f32 %v304, %v305
        %v307 = vrot.slane %v306, 1
        %v308 = vadd.f32 %v306, %v307
        %v309 = vld [vmem:[%s231 + $0x1] sm:$0x1]
        %v310 = vadd.f32 %v309, %v291
        %311 = vst [vmem:[%s231 + $0x1] sm:$0x1] %v310
        %v312 = vld [vmem:[%s273 + $0x1] sm:$0x1]
        %v313 = vadd.f32 %v312, %v299
        %314 = vst [vmem:[%s273 + $0x1] sm:$0x1] %v313
        %v315 = vld [vmem:[%s277 + $0x1] sm:$0x1]
        %v316 = vadd.f32 %v315, %v308
        %317 = vst [vmem:[%s277 + $0x1] sm:$0x1] %v316
        %s318 = scalar_lea.vmem %s197, 4 [#allocation2]
        %v319 = vld [vmem:[%s318] sm:$0x3]
        %vm320 = vcmp.eq.s32.totalorder %v241, 2
        %v321 = vsel %vm320, %v319, 0.0
        %v322 = vsel %vm245, %v321, 0.0
        %v323 = vrot.slane %v322, 4
        %v324 = vadd.f32 %v322, %v323
        %v325 = vrot.slane %v324, 2
        %v326 = vadd.f32 %v324, %v325
        %v327 = vrot.slane %v326, 1
        %v328 = vadd.f32 %v326, %v327
        %v329 = vmul.f32 %v319, %v319
        %v330 = vsel %vm245, %v329, 0.0
        %v331 = vrot.slane %v330, 4
        %v332 = vadd.f32 %v330, %v331
        %v333 = vrot.slane %v332, 2
        %v334 = vadd.f32 %v332, %v333
        %v335 = vrot.slane %v334, 1
        %v336 = vadd.f32 %v334, %v335
        %v337 = vsel %vm320, 1, 0
        %v338 = vcvt.s32.f32 %v337
        %v339 = vsel %vm245, %v338, 0.0
        %v340 = vrot.slane %v339, 4
        %v341 = vadd.f32 %v339, %v340
        %v342 = vrot.slane %v341, 2
        %v343 = vadd.f32 %v341, %v342
        %v344 = vrot.slane %v343, 1
        %v345 = vadd.f32 %v343, %v344
        %v346 = vld [vmem:[%s231 + $0x2] sm:$0x1]
        %v347 = vadd.f32 %v346, %v328
        %348 = vst [vmem:[%s231 + $0x2] sm:$0x1] %v347
        %v349 = vld [vmem:[%s273 + $0x2] sm:$0x1]
        %v350 = vadd.f32 %v349, %v336
        %351 = vst [vmem:[%s273 + $0x2] sm:$0x1] %v350
        %v352 = vld [vmem:[%s277 + $0x2] sm:$0x1]
        %v353 = vadd.f32 %v352, %v345
        %354 = vst [vmem:[%s277 + $0x2] sm:$0x1] %v353
        %s355 = scalar_lea.vmem %s197, 6 [#allocation2]
        %v356 = vld [vmem:[%s355] sm:$0x3]
        %vm357 = vcmp.eq.s32.totalorder %v241, 3
        %v358 = vsel %vm357, %v356, 0.0
        %v359 = vsel %vm245, %v358, 0.0
        %v360 = vrot.slane %v359, 4
        %v361 = vadd.f32 %v359, %v360
        %v362 = vrot.slane %v361, 2
        %v363 = vadd.f32 %v361, %v362
        %v364 = vrot.slane %v363, 1
        %v365 = vadd.f32 %v363, %v364
        %v366 = vmul.f32 %v356, %v356
        %v367 = vsel %vm245, %v366, 0.0
        %v368 = vrot.slane %v367, 4
        %v369 = vadd.f32 %v367, %v368
        %v370 = vrot.slane %v369, 2
        %v371 = vadd.f32 %v369, %v370
        %v372 = vrot.slane %v371, 1
        %v373 = vadd.f32 %v371, %v372
        %v374 = vsel %vm357, 1, 0
        %v375 = vcvt.s32.f32 %v374
        %v376 = vsel %vm245, %v375, 0.0
        %v377 = vrot.slane %v376, 4
        %v378 = vadd.f32 %v376, %v377
        %v379 = vrot.slane %v378, 2
        %v380 = vadd.f32 %v378, %v379
        %v381 = vrot.slane %v380, 1
        %v382 = vadd.f32 %v380, %v381
        %v383 = vld [vmem:[%s231 + $0x3] sm:$0x1]
        %v384 = vadd.f32 %v383, %v365
        %385 = vst [vmem:[%s231 + $0x3] sm:$0x1] %v384
        %v386 = vld [vmem:[%s273 + $0x3] sm:$0x1]
        %v387 = vadd.f32 %v386, %v373
        %388 = vst [vmem:[%s273 + $0x3] sm:$0x1] %v387
        %v389 = vld [vmem:[%s277 + $0x3] sm:$0x1]
        %v390 = vadd.f32 %v389, %v382
        %391 = vst [vmem:[%s277 + $0x3] sm:$0x1] %v390
        %s392 = sand.u32 %s111, 1
        %s393 = scalar_lea.sflag [#allocation4], %s392
        %s394 = sand.u32 %s111, 1
        %s395 = smul.addr %s394, 12
        %s396 = scalar_lea.vmem [#allocation7], %s395
        // Predicated region
        $region41: #{tpu_custom_call.1} parent=27 // pred_check
          %p397 = pneg %p121
        $region42: #{tpu_custom_call.1} parent=27 // pred_check_branch
          %399 = sbr.rel (%p397) target = $region44
        $region43: #{tpu_custom_call.1} parent=27 // pred_region
          %s401 = ssub.s32 192, 192
          %402 = vsyncadd %s393, %s401
          %s403 = smul.addr %s28, 3
          %s404 = smul.addr %s27, 3
          %s405 = sadd.s32 %s403, %s404
          %s406 = smul.addr %s405, 64
          %s407 = scalar_lea.hbm %s2, %s406
          %s408 = sshll.u32 %s396, 4
          %s409 = int_to_ptr.vmem [resolvable:$true] %s408
          %414 = dma.vmem_to_hbm [thread:$0]  %s409, 192, %s407, %s393, 64, 64, 4
        $region44: #{tpu_custom_call.1} parent=27 // pred_fallthru
          _
      $region28: #{tpu_custom_call.1} parent=5 // pred_fallthru
        _
      %p415 = scmp.le.s32.totalorder 2, %s17
      // Predicated region
      $region45: #{tpu_custom_call.1} parent=5 // pred_check
        %p416 = pneg %p415
      $region46: #{tpu_custom_call.1} parent=5 // pred_check_branch
        %418 = sbr.rel (%p416) target = $region48
      $region47: #{tpu_custom_call.1} parent=5 // pred_region
        %s419 = ssub.s32 %s17, 2
        // Predicated region
        $region49: #{tpu_custom_call.1} parent=47 // pred_check
          %p420 = pneg %p127
        $region50: #{tpu_custom_call.1} parent=47 // pred_check_branch
          %422 = sbr.rel (%p420) target = $region52
        $region51: #{tpu_custom_call.1} parent=47 // pred_region
          %s423 = sand.u32 %s112, 1
          %s424 = scalar_lea.sflag [#allocation4], %s423
          %s425 = sand.u32 %s112, 1
          %s426 = smul.addr %s425, 12
          %s427 = scalar_lea.vmem [#allocation7], %s426
          %428 = dma.done %s424, 192
        $region52: #{tpu_custom_call.1} parent=47 // pred_fallthru
          _
      $region48: #{tpu_custom_call.1} parent=5 // pred_fallthru
        _
    $region6: #{tpu_custom_call.1} parent=1 // loop_footer
      %s21 = sadd.s32 1, %s17
    $region7: #{tpu_custom_call.1} parent=1 // loop_footer_branch
      %16 = sbr.rel target = $region3
    $region8: #{tpu_custom_call.1} parent=1 // loop_exit
      _
    %429 = vsyncpa [#allocation3], 1
    %s430 = scalar_lea.sflag [#allocation3], 1
    %431 = vsyncpa %s430, 1
    %432 = vsyncpa [#allocation6], 1
    %s433 = scalar_lea.sflag [#allocation6], 1
    %434 = vsyncpa %s433, 1
    %435 = vsyncpa [#allocation4], 1
    %s436 = scalar_lea.sflag [#allocation4], 1
    %437 = vsyncpa %s436, 1

</llo_original>
